<compile_context>
chip_gen: v7x
topology: tpu7x:2x2x1
jax: 0.10.0
libtpu: 0.0.40
codegen_flags: <defaults>
</compile_context>

<pallas_src>
import functools

import jax
import jax.numpy as jnp
from jax.experimental import pallas as pl
from jax.experimental.pallas import tpu as pltpu


# ----------------------------------------------------------------------------
# Pallas kernel
# ----------------------------------------------------------------------------
def gpm_head_kernel(idx_ref,            # SMEM  (B,) i32   flat row index b*S + last_b
                    hidden_hbm,         # HBM   (B*S, H)   raw ref (memory_space=ANY)
                    w_ref,              # VMEM  (H, D)     value head weight (transposed)
                    out_ref,            # VMEM  (B, D)     output
                    gbuf,               # VMEM  (B, H)     gathered last-token rows
                    sem,                # DMA semaphores, shape (B,)
                    *, batch, eps):
    # --- data-dependent gather: DMA one H-length row per batch element -------
    copies = []
    for b in range(batch):                       # static unroll (batch is small)
        row = idx_ref[b]                         # scalar read from SMEM
        cp = pltpu.make_async_copy(
            hidden_hbm.at[pl.ds(row, 1), :],     # (1, H) row in HBM
            gbuf.at[pl.ds(b, 1), :],             # (1, H) slot in VMEM
            sem.at[b])
        cp.start()
        copies.append(cp)
    for cp in copies:
        cp.wait()

    # --- value head projection: one (B, H) @ (H, D) MXU matmul, f32 acc ------
    x = gbuf[...].astype(jnp.float32)                                  # (B, H)
    w = w_ref[...].astype(jnp.float32)                                 # (H, D)
    r = jnp.dot(x, w, preferred_element_type=jnp.float32)              # (B, D)

    # --- L2 normalize (matches F.normalize: x / max(||x||_2, eps)) -----------
    sq = jnp.sum(r * r, axis=-1, keepdims=True)                        # (B, 1)
    denom = jnp.maximum(jnp.sqrt(sq), eps)
    out_ref[...] = (r / denom).astype(out_ref.dtype)


# ----------------------------------------------------------------------------
# Wrapper
# ----------------------------------------------------------------------------
def gpm_reward_head(hidden_states, attention_mask, value_head_weight,
                    *, eps=1e-12):
    """hidden_states: [B, S, H]; attention_mask: [B, S];
    value_head_weight: [D, H] (PyTorch nn.Linear layout). Returns [B, D]."""
    B, S, H = hidden_states.shape
    D = value_head_weight.shape[0]

    # Last non-pad position per row, flattened to an index into (B*S, H).
    seq_last = jnp.sum(attention_mask.astype(jnp.int32), axis=1) - 1      # (B,)
    flat_idx = (jnp.arange(B, dtype=jnp.int32) * S + seq_last).astype(jnp.int32)

    hidden2d = hidden_states.reshape(B * S, H)        # no-copy view in HBM
    w = value_head_weight.T                           # (H, D), D on lanes

    kernel = functools.partial(gpm_head_kernel, batch=B, eps=eps)

    out = pl.pallas_call(
        kernel,
        out_shape=jax.ShapeDtypeStruct((B, D), jnp.float32),
        grid_spec=pltpu.PrefetchScalarGridSpec(
            num_scalar_prefetch=1,
            grid=(1,),
            in_specs=[
                pl.BlockSpec(memory_space=pl.ANY),            # hidden stays in HBM
                pl.BlockSpec((H, D), lambda i, idx: (0, 0)),  # small weight -> VMEM
            ],
            out_specs=pl.BlockSpec((B, D), lambda i, idx: (0, 0)),
            scratch_shapes=[
                pltpu.VMEM((B, H), hidden_states.dtype),      # gather buffer
                pltpu.SemaphoreType.DMA((B,)),
            ]),
        compiler_params=pltpu.CompilerParams(
            dimension_semantics=("arbitrary",)),
    )(flat_idx, hidden2d, w)
    return out


# ----------------------------------------------------------------------------
# Pure-JAX reference (for correctness check)
# ----------------------------------------------------------------------------
def _reference(hidden_states, attention_mask, value_head_weight, eps=1e-12):
    B = hidden_states.shape[0]
    seq_lengths = jnp.sum(attention_mask, axis=1) - 1
    last_hidden = hidden_states[jnp.arange(B), seq_lengths]          # (B, H)
    r = last_hidden.astype(jnp.float32) @ value_head_weight.astype(jnp.float32).T
    n = jnp.maximum(jnp.sqrt(jnp.sum(r * r, axis=-1, keepdims=True)), eps)
    return r / n


# ----------------------------------------------------------------------------
if __name__ == "__main__":
    B, S, H, D = 2, 8, 32, 8      # batch, seq, hidden_size, value_head_dim

    key = jax.random.PRNGKey(0)
    k1, k2 = jax.random.split(key, 2)

    hidden_states = jax.random.normal(k1, (B, S, H), jnp.float32)
    value_head_weight = jax.random.normal(k2, (D, H), jnp.float32) * 0.1

    # Attention mask with some right padding (lengths S and S-3).
    lens = jnp.array([S, S - 3], dtype=jnp.int32)
    attention_mask = (jnp.arange(S)[None, :] < lens[:, None]).astype(jnp.int32)

    rewards = gpm_reward_head(hidden_states, attention_mask, value_head_weight)
    rewards = jax.block_until_ready(rewards)

    ref = _reference(hidden_states, attention_mask, value_head_weight)
    assert rewards.shape == (B, D)
    assert jnp.allclose(rewards, ref, atol=1e-5, rtol=1e-5), (rewards, ref)

    # TODO(synk): prompt_head (add_prompt_head=True) is not exercised by
    # GPMRewardHead.forward(), so it is intentionally not implemented here.
    print("KERNEL_OK")
</pallas_src>

<mosaic_0001>
module attributes {stable_mosaic.version = 11 : i64} {
  func.func @gpm_head_kernel(%arg0: i32, %arg1: memref<2xi32, #tpu.memory_space<smem>>, %arg2: memref<16x32xf32, #tpu.memory_space<any>>, %arg3: memref<32x8xf32, #tpu.memory_space<vmem>>, %arg4: memref<2x8xf32, #tpu.memory_space<vmem>>, %arg5: memref<2x32xf32, #tpu.memory_space<vmem>>, %arg6: memref<2x!tpu.dma_semaphore, #tpu.memory_space<semaphore_mem>>) attributes {dimension_semantics = [#tpu.dimension_semantics<arbitrary>], iteration_bounds = array<i64: 1>, scalar_prefetch = 1 : i64, scratch_operands = 2 : i64, tpu.core_type = #tpu.core_type<tc>, window_params = [{}, {pipeline_mode = #tpu.pipeline_mode<synchronous>, transform_indices = @transform_1, window_bounds = array<i64: 32, 8>}, {pipeline_mode = #tpu.pipeline_mode<synchronous>, transform_indices = @transform_2, window_bounds = array<i64: 2, 8>}]} {
    %c0 = arith.constant 0 : index
    %0 = memref.load %arg1[%c0] : memref<2xi32, #tpu.memory_space<smem>>
    %c0_i32 = arith.constant 0 : i32
    %c0_i32_0 = arith.constant 0 : i32
    %1 = tpu.memref_slice %arg2[%0, %c0_i32_0] : memref<16x32xf32, #tpu.memory_space<any>> -> memref<1x32xf32, #tpu.memory_space<any>>
    %c0_i32_1 = arith.constant 0 : i32
    %c0_i32_2 = arith.constant 0 : i32
    %2 = tpu.memref_slice %arg5[%c0_i32_1, %c0_i32_2] : memref<2x32xf32, #tpu.memory_space<vmem>> -> memref<1x32xf32, #tpu.memory_space<vmem>>
    %3 = tpu.memref_slice %arg6[%c0_i32] : memref<2x!tpu.dma_semaphore, #tpu.memory_space<semaphore_mem>> -> memref<1x!tpu.dma_semaphore, #tpu.memory_space<semaphore_mem>>
    %4 = tpu.memref_squeeze %3 : memref<1x!tpu.dma_semaphore, #tpu.memory_space<semaphore_mem>> -> memref<!tpu.dma_semaphore, #tpu.memory_space<semaphore_mem>>
    tpu.enqueue_dma source(%1 : memref<1x32xf32, #tpu.memory_space<any>>) target(%2 : memref<1x32xf32, #tpu.memory_space<vmem>>) target_semaphore(%4 : memref<!tpu.dma_semaphore, #tpu.memory_space<semaphore_mem>>)
    %c1 = arith.constant 1 : index
    %5 = memref.load %arg1[%c1] : memref<2xi32, #tpu.memory_space<smem>>
    %c1_i32 = arith.constant 1 : i32
    %c0_i32_3 = arith.constant 0 : i32
    %6 = tpu.memref_slice %arg2[%5, %c0_i32_3] : memref<16x32xf32, #tpu.memory_space<any>> -> memref<1x32xf32, #tpu.memory_space<any>>
    %c1_i32_4 = arith.constant 1 : i32
    %c0_i32_5 = arith.constant 0 : i32
    %7 = tpu.memref_slice %arg5[%c1_i32_4, %c0_i32_5] : memref<2x32xf32, #tpu.memory_space<vmem>> -> memref<1x32xf32, #tpu.memory_space<vmem>>
    %8 = tpu.memref_slice %arg6[%c1_i32] : memref<2x!tpu.dma_semaphore, #tpu.memory_space<semaphore_mem>> -> memref<1x!tpu.dma_semaphore, #tpu.memory_space<semaphore_mem>>
    %9 = tpu.memref_squeeze %8 : memref<1x!tpu.dma_semaphore, #tpu.memory_space<semaphore_mem>> -> memref<!tpu.dma_semaphore, #tpu.memory_space<semaphore_mem>>
    tpu.enqueue_dma source(%6 : memref<1x32xf32, #tpu.memory_space<any>>) target(%7 : memref<1x32xf32, #tpu.memory_space<vmem>>) target_semaphore(%9 : memref<!tpu.dma_semaphore, #tpu.memory_space<semaphore_mem>>)
    %c0_i32_6 = arith.constant 0 : i32
    %c0_i32_7 = arith.constant 0 : i32
    %10 = tpu.memref_slice %arg2[%0, %c0_i32_7] : memref<16x32xf32, #tpu.memory_space<any>> -> memref<1x32xf32, #tpu.memory_space<any>>
    %c0_i32_8 = arith.constant 0 : i32
    %c0_i32_9 = arith.constant 0 : i32
    %11 = tpu.memref_slice %arg5[%c0_i32_8, %c0_i32_9] : memref<2x32xf32, #tpu.memory_space<vmem>> -> memref<1x32xf32, #tpu.memory_space<vmem>>
    %12 = tpu.memref_slice %arg6[%c0_i32_6] : memref<2x!tpu.dma_semaphore, #tpu.memory_space<semaphore_mem>> -> memref<1x!tpu.dma_semaphore, #tpu.memory_space<semaphore_mem>>
    %13 = tpu.memref_squeeze %12 : memref<1x!tpu.dma_semaphore, #tpu.memory_space<semaphore_mem>> -> memref<!tpu.dma_semaphore, #tpu.memory_space<semaphore_mem>>
    tpu.wait_dma2 semaphore(%13 : memref<!tpu.dma_semaphore, #tpu.memory_space<semaphore_mem>>) src(%10 : memref<1x32xf32, #tpu.memory_space<any>>) dst(%11 : memref<1x32xf32, #tpu.memory_space<vmem>>)
    %c1_i32_10 = arith.constant 1 : i32
    %c0_i32_11 = arith.constant 0 : i32
    %14 = tpu.memref_slice %arg2[%5, %c0_i32_11] : memref<16x32xf32, #tpu.memory_space<any>> -> memref<1x32xf32, #tpu.memory_space<any>>
    %c1_i32_12 = arith.constant 1 : i32
    %c0_i32_13 = arith.constant 0 : i32
    %15 = tpu.memref_slice %arg5[%c1_i32_12, %c0_i32_13] : memref<2x32xf32, #tpu.memory_space<vmem>> -> memref<1x32xf32, #tpu.memory_space<vmem>>
    %16 = tpu.memref_slice %arg6[%c1_i32_10] : memref<2x!tpu.dma_semaphore, #tpu.memory_space<semaphore_mem>> -> memref<1x!tpu.dma_semaphore, #tpu.memory_space<semaphore_mem>>
    %17 = tpu.memref_squeeze %16 : memref<1x!tpu.dma_semaphore, #tpu.memory_space<semaphore_mem>> -> memref<!tpu.dma_semaphore, #tpu.memory_space<semaphore_mem>>
    tpu.wait_dma2 semaphore(%17 : memref<!tpu.dma_semaphore, #tpu.memory_space<semaphore_mem>>) src(%14 : memref<1x32xf32, #tpu.memory_space<any>>) dst(%15 : memref<1x32xf32, #tpu.memory_space<vmem>>)
    %c0_14 = arith.constant 0 : index
    %c0_15 = arith.constant 0 : index
    %18 = vector.load %arg5[%c0_14, %c0_15] : memref<2x32xf32, #tpu.memory_space<vmem>>, vector<2x32xf32>
    %c0_16 = arith.constant 0 : index
    %c0_17 = arith.constant 0 : index
    %19 = vector.load %arg3[%c0_16, %c0_17] : memref<32x8xf32, #tpu.memory_space<vmem>>, vector<32x8xf32>
    %cst = arith.constant dense<0.000000e+00> : vector<2x8xf32>
    %20 = tpu.matmul %18, %19, %cst {dimension_numbers = #tpu.dot_dimension_numbers<[1], [0], [0], [1], [0, 0, 1, 1], [], []>} : vector<2x32xf32>, vector<32x8xf32>, vector<2x8xf32> -> vector<2x8xf32>
    %21 = arith.mulf %20, %20 : vector<2x8xf32>
    %cst_18 = arith.constant dense<0.000000e+00> : vector<2xf32>
    %22 = vector.multi_reduction <add>, %21, %cst_18 [1] : vector<2x8xf32> to vector<2xf32>
    %23 = vector.shape_cast %22 : vector<2xf32> to vector<2x1xf32>
    %24 = math.sqrt %23 : vector<2x1xf32>
    %cst_19 = arith.constant 9.99999996E-13 : f32
    %25 = vector.broadcast %cst_19 : f32 to vector<2x1xf32>
    %26 = arith.maximumf %24, %25 : vector<2x1xf32>
    %27 = vector.broadcast %26 : vector<2x1xf32> to vector<2x8xf32>
    %28 = arith.divf %20, %27 : vector<2x8xf32>
    %c0_20 = arith.constant 0 : index
    %c0_21 = arith.constant 0 : index
    %29 = vector.load %arg4[%c0_20, %c0_21] : memref<2x8xf32, #tpu.memory_space<vmem>>, vector<2x8xf32>
    tpu.vector_store %arg4[%c0_20, %c0_21], %28 {strides = array<i32>} : memref<2x8xf32, #tpu.memory_space<vmem>>, vector<2x8xf32>,
    return
  }
  func.func @transform_1(%arg0: i32, %arg1: memref<2xi32, #tpu.memory_space<smem>>) -> (i32, i32) {
    %c0_i32 = arith.constant 0 : i32
    %c0_i32_0 = arith.constant 0 : i32
    %c0_i32_1 = arith.constant 0 : i32
    return %c0_i32, %c0_i32_0 : i32, i32
  }
  func.func @transform_2(%arg0: i32, %arg1: memref<2xi32, #tpu.memory_space<smem>>) -> (i32, i32) {
    %c0_i32 = arith.constant 0 : i32
    %c0_i32_0 = arith.constant 0 : i32
    %c0_i32_1 = arith.constant 0 : i32
    return %c0_i32, %c0_i32_0 : i32, i32
  }
}

</mosaic_0001>

<llo_original>
// kernel: tpu_custom_call.1
$region0: #{tpu_custom_call.1}
  #allocation0 [shape = 'u32[]', space=smem, size = 0x4, offset = 0x4, fixed_abs, tag = 'smem constant byte address 0x4 - core index']
  #allocation1 [shape = 'u32[144,128]{1,0:T(1,128)}', space=vmem, size = 0x12000, scoped, tag = 'internal scratch']
  #allocation2 [shape = 'f32[2,32]{1,0:T(2,128)}', space=vmem, size = 0x400, scoped, tag = 'scratch operand']
  #allocation3 [shape = 's32[2]{0}', space=sflag, size = 0x8, scoped, tag = 'scratch operand']
  #allocation4 [shape = 's32[1]{0}', space=sflag, size = 0x4, scoped, tag = 'scoped memory for tpu_custom_call.1']
  #allocation5 [shape = 'u8[512]{0}', space=smem, size = 0x200, scoped, tag = 'prefetched SMEM operand 0']
  #allocation8 [shape = 's32[]', space=sflag, size = 0x4, offset = 0, fixed_abs, tag = 'sflag constant byte address 0x0 - dummy sync flag']
  #allocation9 [shape = 's32[]', space=sflag, size = 0x4, offset = 0, fixed_abs, tag = 'sflag constant byte address 0x0 - dummy sync flag']
  %s0 = inlined_call_operand.vmem [shape: s32[2], index: 0, kind: input, shape index: {}]
  %s1 = inlined_call_operand.vmem [shape: f32[16,32], index: 1, kind: input, shape index: {}]
  %s2 = inlined_call_operand.vmem [shape: f32[32,8], index: 2, kind: input, shape index: {}]
  %s3 = inlined_call_operand.hbm [shape: f32[2,8], index: 3, kind: output, shape index: {}]
  %s4 = sld [smem:[#allocation0]]
  $region74: #{tpu_custom_call.1} parent=0
    _
  %s6 = ssub.s32 1, %s4
  %s7 = scalar_select 0, %s6, %s4
  %s8 = sshll.u32 %s0, 4
  %s9 = int_to_ptr.vmem [resolvable:$true] %s8
  %11 = dma.vmem_to_smem %s9, 16, [#allocation5], [#allocation4]
  %12 = dma.done [#allocation4], 16
  %13 = sfence
  $region1: #{tpu_custom_call.1} parent=0
    #allocation6 [shape = 'u8[1024]{0}', space=vmem, size = 0x400, scoped, tag = 'output window, operand 0, single buffered']
    #allocation7 [shape = 's32[1]{0}', space=sflag, size = 0x4, scoped, tag = 'scoped memory for tpu_custom_call.1']
    %14 = vsyncpa [#allocation7], 0
    // Predicated region
    $region2: #{tpu_custom_call.1} parent=1 // pred_check
      _
    $region3: #{tpu_custom_call.1} parent=1 // pred_check_branch
      %16 = sbr.rel (0) target = $region5
    $region4: #{tpu_custom_call.1} parent=1 // pred_region
      _
    $region5: #{tpu_custom_call.1} parent=1 // pred_fallthru
      _
    %s17 = sld [smem:[#allocation5]]
    %s18 = scalar_lea.vmem %s1, %s17
    %p20 = scmp.lt.u32.totalorder 1, 8
    %p21 = pneg %p20
    // Predicated region
    $region6: #{tpu_custom_call.1} parent=1 // pred_check
      _
    $region7: #{tpu_custom_call.1} parent=1 // pred_check_branch
      %23 = sbr.rel (%p20) target = $region9
    $region8: #{tpu_custom_call.1} parent=1 // pred_region
      %s38 = sand.u32 1, 7
      %p39 = scmp.eq.s32.totalorder %s38, 0
      %p40 = pneg %p39
      // Predicated region
      $region21: #{tpu_custom_call.1} parent=8 // pred_check
        _
      $region22: #{tpu_custom_call.1} parent=8 // pred_check_branch
        %42 = sbr.rel (%p39) target = $region24
      $region23: #{tpu_custom_call.1} parent=8 // pred_region
        %s43 = sand.u32 1, 7
        %s44 = ssub.s32 1, %s43
        %s45 = scalar_lea.vmem %s18, %s44
        %s46 = ssub.s32 1, %s43
        %s47 = scalar_lea.vmem [#allocation2], %s46
        %s48 = sshllo.u32 0, %s43
        loop: start=0, step=1, limit=1
        $region25: #{tpu_custom_call.1} parent=23 // loop_pre_header
          _
        $region26: #{tpu_custom_call.1} parent=23 // loop_header
          %s50 = sphi 0, %s54
          %p51 = scmp.ge.s32.totalorder %s50, 1
          %s55 = sphi %s45, %s45
          %s56 = sphi %s47, %s47
        $region27: #{tpu_custom_call.1} parent=23 // loop_header_branch
          %53 = sbr.rel (%p51) target = $region31
        $region28: #{tpu_custom_call.1} parent=23 // loop_body
          %v57 = vld [vmem:[%s55] sm:%s48]
          %58 = vst [vmem:[%s56] sm:%s48] %v57
        $region29: #{tpu_custom_call.1} parent=23 // loop_footer
          %s54 = sadd.s32 1, %s50
        $region30: #{tpu_custom_call.1} parent=23 // loop_footer_branch
          %49 = sbr.rel target = $region26
        $region31: #{tpu_custom_call.1} parent=23 // loop_exit
          _
      $region24: #{tpu_custom_call.1} parent=8 // pred_fallthru
        _
    $region9: #{tpu_custom_call.1} parent=1 // pred_fallthru
      _
    // Predicated region
    $region10: #{tpu_custom_call.1} parent=1 // pred_check
      %p24 = pneg %p20
    $region11: #{tpu_custom_call.1} parent=1 // pred_check_branch
      %26 = sbr.rel (%p24) target = $region13
    $region12: #{tpu_custom_call.1} parent=1 // pred_region
      %s27 = sshllo.u32 0, 1
      loop: start=0, step=1, limit=1
      $region14: #{tpu_custom_call.1} parent=12 // loop_pre_header
        _
      $region15: #{tpu_custom_call.1} parent=12 // loop_header
        %s29 = sphi 0, %s33
        %p30 = scmp.ge.s32.totalorder %s29, 1
        %s34 = sphi %s18, %s18
        %s35 = sphi [#allocation2], [#allocation2]
      $region16: #{tpu_custom_call.1} parent=12 // loop_header_branch
        %32 = sbr.rel (%p30) target = $region20
      $region17: #{tpu_custom_call.1} parent=12 // loop_body
        %v36 = vld [vmem:[%s34] sm:%s27]
        %37 = vst [vmem:[%s35] sm:%s27] %v36
      $region18: #{tpu_custom_call.1} parent=12 // loop_footer
        %s33 = sadd.s32 1, %s29
      $region19: #{tpu_custom_call.1} parent=12 // loop_footer_branch
        %28 = sbr.rel target = $region15
      $region20: #{tpu_custom_call.1} parent=12 // loop_exit
        _
    $region13: #{tpu_custom_call.1} parent=1 // pred_fallthru
      _
    // Predicated region
    $region32: #{tpu_custom_call.1} parent=1 // pred_check
      _
    $region33: #{tpu_custom_call.1} parent=1 // pred_check_branch
      %61 = sbr.rel (0) target = $region35
    $region34: #{tpu_custom_call.1} parent=1 // pred_region
      %62 = vsyncadd [#allocation3], 16
    $region35: #{tpu_custom_call.1} parent=1 // pred_fallthru
      _
    %s63 = sld [smem:[#allocation5 + $0x1]]
    %s64 = scalar_lea.vmem %s1, %s63
    %s65 = scalar_lea.vmem [#allocation2], 1
    %s66 = scalar_lea.sflag [#allocation3], 1
    %p68 = scmp.lt.u32.totalorder 1, 8
    %p69 = pneg %p68
    // Predicated region
    $region36: #{tpu_custom_call.1} parent=1 // pred_check
      _
    $region37: #{tpu_custom_call.1} parent=1 // pred_check_branch
      %71 = sbr.rel (%p68) target = $region39
    $region38: #{tpu_custom_call.1} parent=1 // pred_region
      %s86 = sand.u32 1, 7
      %p87 = scmp.eq.s32.totalorder %s86, 0
      %p88 = pneg %p87
      // Predicated region
      $region51: #{tpu_custom_call.1} parent=38 // pred_check
        _
      $region52: #{tpu_custom_call.1} parent=38 // pred_check_branch
        %90 = sbr.rel (%p87) target = $region54
      $region53: #{tpu_custom_call.1} parent=38 // pred_region
        %s91 = sand.u32 1, 7
        %s92 = ssub.s32 1, %s91
        %s93 = scalar_lea.vmem %s64, %s92
        %s94 = ssub.s32 1, %s91
        %s95 = scalar_lea.vmem %s65, %s94 [#allocation2]
        %s96 = sshllo.u32 0, %s91
        loop: start=0, step=1, limit=1
        $region55: #{tpu_custom_call.1} parent=53 // loop_pre_header
          _
        $region56: #{tpu_custom_call.1} parent=53 // loop_header
          %s98 = sphi 0, %s102
          %p99 = scmp.ge.s32.totalorder %s98, 1
          %s103 = sphi %s93, %s93
          %s104 = sphi %s95, %s95
        $region57: #{tpu_custom_call.1} parent=53 // loop_header_branch
          %101 = sbr.rel (%p99) target = $region61
        $region58: #{tpu_custom_call.1} parent=53 // loop_body
          %v105 = vld [vmem:[%s103] sm:%s96]
          %106 = vst [vmem:[%s104] sm:%s96] %v105
        $region59: #{tpu_custom_call.1} parent=53 // loop_footer
          %s102 = sadd.s32 1, %s98
        $region60: #{tpu_custom_call.1} parent=53 // loop_footer_branch
          %97 = sbr.rel target = $region56
        $region61: #{tpu_custom_call.1} parent=53 // loop_exit
          _
      $region54: #{tpu_custom_call.1} parent=38 // pred_fallthru
        _
    $region39: #{tpu_custom_call.1} parent=1 // pred_fallthru
      _
    // Predicated region
    $region40: #{tpu_custom_call.1} parent=1 // pred_check
      %p72 = pneg %p68
    $region41: #{tpu_custom_call.1} parent=1 // pred_check_branch
      %74 = sbr.rel (%p72) target = $region43
    $region42: #{tpu_custom_call.1} parent=1 // pred_region
      %s75 = sshllo.u32 0, 1
      loop: start=0, step=1, limit=1
      $region44: #{tpu_custom_call.1} parent=42 // loop_pre_header
        _
      $region45: #{tpu_custom_call.1} parent=42 // loop_header
        %s77 = sphi 0, %s81
        %p78 = scmp.ge.s32.totalorder %s77, 1
        %s82 = sphi %s64, %s64
        %s83 = sphi %s65, %s65
      $region46: #{tpu_custom_call.1} parent=42 // loop_header_branch
        %80 = sbr.rel (%p78) target = $region50
      $region47: #{tpu_custom_call.1} parent=42 // loop_body
        %v84 = vld [vmem:[%s82] sm:%s75]
        %85 = vst [vmem:[%s83] sm:%s75] %v84
      $region48: #{tpu_custom_call.1} parent=42 // loop_footer
        %s81 = sadd.s32 1, %s77
      $region49: #{tpu_custom_call.1} parent=42 // loop_footer_branch
        %76 = sbr.rel target = $region45
      $region50: #{tpu_custom_call.1} parent=42 // loop_exit
        _
    $region43: #{tpu_custom_call.1} parent=1 // pred_fallthru
      _
    // Predicated region
    $region62: #{tpu_custom_call.1} parent=1 // pred_check
      _
    $region63: #{tpu_custom_call.1} parent=1 // pred_check_branch
      %109 = sbr.rel (0) target = $region65
    $region64: #{tpu_custom_call.1} parent=1 // pred_region
      %110 = vsyncadd %s66, 16
    $region65: #{tpu_custom_call.1} parent=1 // pred_fallthru
      _
    %s111 = smul.u32 1, 1
    %s112 = sshll.u32 %s111, 4
    %113 = dma.done [#allocation3], %s112
    %s114 = sshll.u32 %s111, 4
    %115 = dma.done %s66, %s114
    %v116 = vld [vmem:[#allocation2] sm:$0x3]
    %v117 = vld [vmem:[%s2] sm:$0xff]
    %v118 = vld [vmem:[%s2 + $0x8] sm:$0xff]
    %v119 = vld [vmem:[%s2 + $0x10] sm:$0xff]
    %v120 = vld [vmem:[%s2 + $0x18] sm:$0xff]
    %vm121 = vcmask 261120
    %v123 = vsel %vm121, %v116, 0
    %125 = vmatprep.subr.mxu0 0.0
    %126 = vmatpush1.msra.mxu0 %v117
    %127 = vmatprep.subr.mxu0 0.0
    %128 = vmatpush1.msra.mxu0 %v118
    %129 = vmatprep.subr.mxu0 0.0
    %130 = vmatpush1.msra.mxu0 %v119
    %131 = vmatprep.subr.mxu0 0.0
    %132 = vmatpush1.msra.mxu0 %v120
    %133 = vmatprep.subr.mxu0 0.0
    %134 = vmatpush1.msra.mxu0 0.0
    %135 = vmatprep.subr.mxu0 0.0
    %136 = vmatpush1.msra.mxu0 0.0
    %137 = vmatprep.subr.mxu0 0.0
    %138 = vmatpush1.msra.mxu0 0.0
    %139 = vmatprep.subr.mxu0 0.0
    %140 = vmatpush1.msra.mxu0 0.0
    %141 = vmatprep.subr.mxu0 0.0
    %142 = vmatpush1.msra.mxu0 0.0
    %143 = vmatprep.subr.mxu0 0.0
    %144 = vmatpush1.msra.mxu0 0.0
    %145 = vmatprep.subr.mxu0 0.0
    %146 = vmatpush1.msra.mxu0 0.0
    %147 = vmatprep.subr.mxu0 0.0
    %148 = vmatpush1.msra.mxu0 0.0
    %149 = vmatprep.subr.mxu0 0.0
    %150 = vmatpush1.msra.mxu0 0.0
    %151 = vmatprep.subr.mxu0 0.0
    %152 = vmatpush1.msra.mxu0 0.0
    %153 = vmatprep.subr.mxu0 0.0
    %154 = vmatpush1.msra.mxu0 0.0
    %155 = vmatprep.subr.mxu0 0.0
    %156 = vmatpush1.msra.mxu0 0.0
    %157 = vmatprep.subr.mxu0 0.0
    %158 = vmatpush1.msra.mxu0 0.0
    %159 = vmatprep.subr.mxu0 0.0
    %160 = vmatpush1.msra.mxu0 0.0
    %161 = vmatprep.subr.mxu0 0.0
    %162 = vmatpush1.msra.mxu0 0.0
    %163 = vmatprep.subr.mxu0 0.0
    %164 = vmatpush1.msra.mxu0 0.0
    %165 = vmatprep.subr.mxu0 0.0
    %166 = vmatpush1.msra.mxu0 0.0
    %167 = vmatprep.subr.mxu0 0.0
    %168 = vmatpush1.msra.mxu0 0.0
    %169 = vmatprep.subr.mxu0 0.0
    %170 = vmatpush1.msra.mxu0 0.0
    %171 = vmatprep.subr.mxu0 0.0
    %172 = vmatpush1.msra.mxu0 0.0
    %173 = vmatprep.subr.mxu0 0.0
    %174 = vmatpush1.msra.mxu0 0.0
    %175 = vmatprep.subr.mxu0 0.0
    %176 = vmatpush1.msra.mxu0 0.0
    %177 = vmatprep.subr.mxu0 0.0
    %178 = vmatpush1.msra.mxu0 0.0
    %179 = vmatprep.subr.mxu0 0.0
    %180 = vmatpush1.msra.mxu0 0.0
    %181 = vmatprep.subr.mxu0 0.0
    %182 = vmatpush1.msra.mxu0 0.0
    %183 = vmatprep.subr.mxu0 0.0
    %184 = vmatpush1.msra.mxu0 0.0
    %185 = vmatprep.subr.mxu0 0.0
    %186 = vmatpush1.msra.mxu0 0.0
    %187 = vmatprep.subr.mxu0 0.0
    %188 = vmatpush1.msra.mxu0 0.0
    %189 = vmatprep.mubr.f32.mxu0 0.0
    %190 = vmatmul.mubr.f32.gmra.mrb[0].mxu0 %v123
    %v191 = vpop.f32.mrb[0].mxu0
    %v192 = vadd.f32 0.0, %v191
    %v193 = vpop.f32.mrb[0].mxu0
    %194 = vdwg.mxu0
    %v195 = vmul.f32 %v192, %v192
    %vm196 = vcmask 58368
    %v197 = vsel %vm196, %v195, 0.0
    %198 = vadd.xlane.f32.xlu0 %v197
    %v199 = vpop.xlane.xlu0 %198
    %v200 = vrsqrt.pop %v199
    %v201 = vmul.f32 %v199, %v200
    %vm202 = vcmp.eq.f32.partialorder %v199, inf
    %v203 = vsel %vm202, %v199, %v201
    %vm204 = vcmp.eq.f32.partialorder %v199, 0.0
    %v205 = vand.u32 %v199, 2147483648
    %v206 = vsel %vm204, %v205, %v203
    %v207 = vmax.f32 %v206, 1e-12
    %v208 = vrcp.pop %v207
    %v209 = vmul.f32 %v192, %v208
    %210 = vst.msk [vmem:[#allocation6] sm:$0x3] %vm196, %v209
    // Predicated region
    $region66: #{tpu_custom_call.1} parent=1 // pred_check
      _
    $region67: #{tpu_custom_call.1} parent=1 // pred_check_branch
      %212 = sbr.rel (0) target = $region69
    $region68: #{tpu_custom_call.1} parent=1 // pred_region
      %s214 = ssub.s32 32, 32
      %215 = vsyncadd [#allocation7], %s214
      %s217 = sshll.u32 [#allocation6], 4
      %s218 = int_to_ptr.vmem [resolvable:$true] %s217
      %220 = dma.vmem_to_hbm [thread:$0]  %s218, 32, %s3, [#allocation7]
    $region69: #{tpu_custom_call.1} parent=1 // pred_fallthru
      _
    // Predicated region
    $region70: #{tpu_custom_call.1} parent=1 // pred_check
      _
    $region71: #{tpu_custom_call.1} parent=1 // pred_check_branch
      %222 = sbr.rel (0) target = $region73
    $region72: #{tpu_custom_call.1} parent=1 // pred_region
      %223 = dma.done [#allocation7], 32
    $region73: #{tpu_custom_call.1} parent=1 // pred_fallthru
      _
    %224 = vsyncpa [#allocation7], 1
  %225 = vsyncmov [#allocation3]
  %s226 = vpop.sfrf %225
  %p227 = scmp.eq.s32.totalorder %s226, 0
  %p228 = pneg %p227
  %230 = shalt.err (%p228)
  %s231 = scalar_lea.sflag [#allocation3], 1
  %232 = vsyncmov %s231
  %s233 = vpop.sfrf %232
  %p234 = scmp.eq.s32.totalorder %s233, 0
  %p235 = pneg %p234
  %237 = shalt.err (%p235)

</llo_original>
